<compile_context>
chip_gen: v5e
topology: v5e:2x2
jax: 0.10.0
libtpu: 0.0.40
codegen_flags: <defaults>
</compile_context>

<pallas_src>
import jax
import jax.numpy as jnp
from jax.experimental import pallas as pl
from jax.experimental.pallas import tpu as pltpu


_LANE = 128
_MIB = 1024 * 1024


def _add_pos_kernel(x_ref, pos_ref, o_ref):
    # x_ref / pos_ref / o_ref: (TS, LANES) tiles, same dtype. Whole-vreg VPU add.
    o_ref[...] = x_ref[...] + pos_ref[...]


def _sublane(dtype) -> int:
    """Packed sublane tile height: 8 for 32-bit, 16 for bf16/f16, 32 for 8-bit."""
    return max(8, 32 // jnp.dtype(dtype).itemsize)


def _vmem_capacity_bytes() -> int:
    """Physical VMEM per TensorCore; conservative 64 MiB (v7x) fallback."""
    try:
        cap = int(pltpu.get_tpu_info().vmem_capacity_bytes)
        if cap >= 16 * _MIB:
            return cap
    except Exception:
        pass
    return 64 * _MIB


def _pick_layout(S, H):
    """Choose a lane-dense 2-D (rows, lanes) view of the (S, H) plane."""
    if H % _LANE == 0:
        return S, H, False
    if (S * H) % _LANE == 0:
        lanes = _LANE
        # Widest lane count dividing S*H -> longer unmasked vst runs,
        # fewer DMA descriptors per tile.
        for cand in (4096, 2048, 1024, 512, 256):
            if (S * H) % cand == 0:
                lanes = cand
                break
        return (S * H) // lanes, lanes, True
    # TODO(synk): S*H not divisible by 128 keeps H (<128) as the lane dim;
    # stores become masked vst.msk — correct but slow.
    return S, H, False


def _pick_tile(rows, lanes, itemsize, budget_bytes, sub):
    """Row-tile size: budget split over ~6 resident buffers, sublane-aligned."""
    per_buf = max(1, budget_bytes // 6)   # x, pos, out; each double-buffered
    ts = per_buf // max(1, lanes * itemsize)
    if ts >= rows:
        return rows
    ts = max(sub, (ts // sub) * sub)
    return min(ts, rows)


def learnable_position_embedding_add(embeddings: jax.Array,
                                     pos_table: jax.Array) -> jax.Array:
    """embeddings: (B, S, H); pos_table: (S, H), S == max_position_embeddings."""
    B, S, H = embeddings.shape
    assert pos_table.shape == (S, H)

    # Cast the learned table to the activation dtype in the wrapper (halves
    # pos DMA traffic for bf16 activations; keeps VMEM accounting exact).
    if pos_table.dtype != embeddings.dtype:
        pos_table = pos_table.astype(embeddings.dtype)

    rows, lanes, flat = _pick_layout(S, H)
    x2 = embeddings.reshape(B, rows, lanes) if flat else embeddings
    p2 = pos_table.reshape(rows, lanes) if flat else pos_table

    itemsize = jnp.dtype(embeddings.dtype).itemsize
    sub = _sublane(embeddings.dtype)

    vmem_cap = _vmem_capacity_bytes()
    # Generation-aware working-set budget:
    #   v7x (64 MiB physical)      -> 40 MiB budget -> ~6-7 MiB tiles
    #   v5e/v6e (128 MiB physical) -> 80 MiB budget -> ~13 MiB tiles
    budget = min((vmem_cap * 5) // 8, 96 * _MIB)
    ts = _pick_tile(rows, lanes, itemsize, budget, sub)

    # v7x has 2 TensorCores: if the batch axis alone cannot feed both,
    # split the row axis so the grid has >= 2 steps.
    if B == 1 and ts >= rows and rows >= 2 * sub:
        half = pl.cdiv(rows, 2)
        ts = ((half + sub - 1) // sub) * sub

    num_row_tiles = pl.cdiv(rows, ts)

    # Explicit VMEM limit = computed need + headroom for Mosaic scratch,
    # never the full physical VMEM. Explicit also covers v5e's 16 MiB
    # scoped default being below the plan.
    tile_bytes = ts * lanes * itemsize
    needed = 6 * tile_bytes
    vmem_limit = int(min(max(needed + 8 * _MIB, 16 * _MIB),
                         max(vmem_cap - 8 * _MIB, 16 * _MIB)))

    cost = pl.CostEstimate(
        flops=B * S * H,
        transcendentals=0,
        bytes_accessed=2 * B * S * H * itemsize + S * H * itemsize,
    )

    out = pl.pallas_call(
        _add_pos_kernel,
        out_shape=jax.ShapeDtypeStruct((B, rows, lanes), embeddings.dtype),
        grid_spec=pltpu.PrefetchScalarGridSpec(
            num_scalar_prefetch=0,
            # Batch innermost: pos tile's block index depends only on the
            # row-tile axis, so it stays resident while sweeping the batch.
            grid=(num_row_tiles, B),
            in_specs=[
                # x: batch dim squeezed -> kernel sees (ts, lanes)
                pl.BlockSpec((None, ts, lanes), lambda s, b: (b, s, 0)),
                # pos table tile, shared across the batch
                pl.BlockSpec((ts, lanes), lambda s, b: (s, 0)),
            ],
            out_specs=pl.BlockSpec((None, ts, lanes), lambda s, b: (b, s, 0)),
        ),
        # Output overwrites the embeddings buffer inside the call
        # (PyTorch `embeddings += ...`); donate at jit for true in-place.
        input_output_aliases={0: 0},
        compiler_params=pltpu.CompilerParams(
            dimension_semantics=("parallel", "parallel"),
            vmem_limit_bytes=vmem_limit,
        ),
        cost_estimate=cost,
    )(x2, p2)

    return out.reshape(B, S, H) if flat else out


if __name__ == "__main__":
    # Small shapes consistent with the module's forward:
    # max_position_embeddings = S = 8, hidden_size = H = 32, batch = 2.
    B, S, H = 2, 8, 32
    key = jax.random.PRNGKey(0)
    k_emb, k_tab = jax.random.split(key)

    # Input embeddings (B, S, H) and deterministic "learned" position table
    # (S, H) (synthetic init standing in for nn.Embedding's weight).
    embeddings = jax.random.normal(k_emb, (B, S, H), dtype=jnp.float32)
    pos_table = jax.random.normal(k_tab, (S, H), dtype=jnp.float32)

    # Reference computed before the kernel call (output aliases the input).
    ref = embeddings + pos_table[None, :, :]

    out = learnable_position_embedding_add(embeddings, pos_table)
    out = jax.block_until_ready(out)

    assert out.shape == (B, S, H)
    assert out.dtype == embeddings.dtype
    assert jnp.allclose(out, ref, atol=1e-6), "mismatch vs reference"

    print("KERNEL_OK")
</pallas_src>

<mosaic_0001>
module attributes {stable_mosaic.version = 11 : i64} {
  func.func @_add_pos_kernel(%arg0: i32, %arg1: i32, %arg2: memref<1x1x256xf32, #tpu.memory_space<vmem>>, %arg3: memref<1x256xf32, #tpu.memory_space<vmem>>, %arg4: memref<1x1x256xf32, #tpu.memory_space<vmem>>) attributes {dimension_semantics = [#tpu.dimension_semantics<parallel>, #tpu.dimension_semantics<parallel>], iteration_bounds = array<i64: 1, 2>, scalar_prefetch = 0 : i64, scratch_operands = 0 : i64, tpu.core_type = #tpu.core_type<tc>, window_params = [{transform_indices = @transform_0, window_bounds = array<i64: 1, 1, 256>}, {transform_indices = @transform_1, window_bounds = array<i64: 1, 256>}, {transform_indices = @transform_2, window_bounds = array<i64: 1, 1, 256>}]} {
    %c0 = arith.constant 0 : index
    %c0_0 = arith.constant 0 : index
    %c0_1 = arith.constant 0 : index
    %0 = vector.load %arg2[%c0, %c0_0, %c0_1] : memref<1x1x256xf32, #tpu.memory_space<vmem>>, vector<1x1x256xf32>
    %1 = vector.shape_cast %0 : vector<1x1x256xf32> to vector<1x256xf32>
    %c0_2 = arith.constant 0 : index
    %c0_3 = arith.constant 0 : index
    %2 = vector.load %arg3[%c0_2, %c0_3] : memref<1x256xf32, #tpu.memory_space<vmem>>, vector<1x256xf32>
    %3 = arith.addf %1, %2 : vector<1x256xf32>
    %c0_4 = arith.constant 0 : index
    %c0_5 = arith.constant 0 : index
    %c0_6 = arith.constant 0 : index
    %4 = vector.load %arg4[%c0_4, %c0_5, %c0_6] : memref<1x1x256xf32, #tpu.memory_space<vmem>>, vector<1x1x256xf32>
    %5 = vector.shape_cast %4 : vector<1x1x256xf32> to vector<1x256xf32>
    %6 = vector.shape_cast %3 : vector<1x256xf32> to vector<1x1x256xf32>
    tpu.vector_store %arg4[%c0_4, %c0_5, %c0_6], %6 {strides = array<i32>} : memref<1x1x256xf32, #tpu.memory_space<vmem>>, vector<1x1x256xf32>,
    return
  }
  func.func @transform_0(%arg0: i32, %arg1: i32) -> (i32, i32, i32) {
    %c0_i32 = arith.constant 0 : i32
    %c0_i32_0 = arith.constant 0 : i32
    return %arg1, %arg0, %c0_i32 : i32, i32, i32
  }
  func.func @transform_1(%arg0: i32, %arg1: i32) -> (i32, i32) {
    %c0_i32 = arith.constant 0 : i32
    %c0_i32_0 = arith.constant 0 : i32
    return %arg0, %c0_i32 : i32, i32
  }
  func.func @transform_2(%arg0: i32, %arg1: i32) -> (i32, i32, i32) {
    %c0_i32 = arith.constant 0 : i32
    %c0_i32_0 = arith.constant 0 : i32
    return %arg1, %arg0, %c0_i32 : i32, i32, i32
  }
}

</mosaic_0001>

<llo_original>
// kernel: tpu_custom_call.1
$region0: #{tpu_custom_call.1}
  #allocation0 [shape = 'u32[]', space=smem, size = 0x4, offset = 0x4, fixed_abs, tag = 'smem constant byte address 0x4 - core index']
  #allocation1 [shape = 'u32[72,128]{1,0:T(1,128)}', space=vmem, size = 0x9000, scoped, tag = 'internal scratch']
  %s0 = inlined_call_operand.hbm [shape: f32[2,1,256], index: 0, kind: input, shape index: {}, may-alias: {0,2}]
  %s1 = inlined_call_operand.vmem [shape: f32[1,256], index: 1, kind: input, shape index: {}]
  %s2 = inlined_call_operand.hbm [shape: f32[2,1,256], index: 2, kind: output, shape index: {}, may-alias: {0,2}]
  %s3 = sld [smem:[#allocation0]]
  $region45: #{tpu_custom_call.1} parent=0
    _
  %s5 = ssub.s32 1, %s3
  %s6 = scalar_select 0, %s5, %s3
  $region1: #{tpu_custom_call.1} parent=0
    #allocation2 [shape = 'u8[2048]{0}', space=vmem, size = 0x800, scoped, tag = 'input window, operand 0']
    #allocation3 [shape = 's32[2]{0}', space=sflag, size = 0x8, scoped, tag = 'scoped memory for tpu_custom_call.1']
    #allocation4 [shape = 's32[2]{0}', space=sflag, size = 0x8, scoped, tag = 'scoped memory for tpu_custom_call.1']
    #allocation5 [shape = 'u8[2048]{0}', space=vmem, size = 0x800, scoped, tag = 'output window, operand 0']
    %7 = vsyncpa [#allocation3], 0
    %s8 = scalar_lea.sflag [#allocation3], 1
    %9 = vsyncpa %s8, 0
    %10 = vsyncpa [#allocation4], 0
    %s11 = scalar_lea.sflag [#allocation4], 1
    %12 = vsyncpa %s11, 0
    loop: start=0, step=1, limit=4
    $region2: #{tpu_custom_call.1} parent=1 // loop_pre_header
      _
    $region3: #{tpu_custom_call.1} parent=1 // loop_header
      %s14 = sphi 0, %s18
      %p15 = scmp.ge.s32.totalorder %s14, 4
      %s21 = sphi 0, %s33
      %s22 = sphi 0, %s29
      %s23 = sphi 0, %s21
      %s24 = sphi 0, %s22
      %s25 = sphi 0, %s23
      %s26 = sphi 0, %s24
      %s38 = sphi 0, %s40
      %s41 = sphi 0, %s38
      %s42 = sphi 0, %s41
      %s58 = sphi 0, %s42
      %s64 = sphi 0, %s66
      %s67 = sphi 0, %s64
      %s68 = sphi 0, %s67
      %s84 = sphi 0, %s68
      %s92 = sphi 0, %s94
      %s95 = sphi 0, %s92
      %s96 = sphi 0, %s95
      %s112 = sphi 0, %s96
    $region4: #{tpu_custom_call.1} parent=1 // loop_header_branch
      %17 = sbr.rel (%p15) target = $region8
    $region5: #{tpu_custom_call.1} parent=1 // loop_body
      %s19 = ssub.s32 %s14, 1
      %s20 = ssub.s32 %s14, 2
      %s27 = sadd.s32 1, %s22
      %p28 = scmp.ge.s32.totalorder %s27, 2
      %s29 = scalar_select %p28, 0, %s27
      %s30 = sadd.s32 1, %s21
      %s31 = scalar_select %p28, %s30, %s21
      %p32 = scmp.ge.s32.totalorder %s31, 1
      %s33 = scalar_select %p32, 0, %s31
      %s34 = ssub.s32 %s22, %s29
      %s35 = ssub.s32 %s21, %s33
      %s36 = sor.u32 %s34, %s35
      %p37 = scmp.eq.s32.totalorder %s36, 0
      %s39 = sadd.s32 %s38, 1
      %s40 = scalar_select %p37, %s38, %s39
      %p43 = pneg %p37
      %p44 = scmp.eq.s32.totalorder %s14, 1
      %p45 = por %p43, %p44
      %p46 = scmp.ne.s32.totalorder %s38, %s41
      %p47 = scmp.eq.s32.totalorder %s14, 0
      %p48 = por %p46, %p47
      %p49 = scmp.ne.s32.totalorder %s38, %s41
      %p50 = scmp.eq.s32.totalorder %s19, 1
      %p51 = por %p49, %p50
      %p52 = scmp.ne.s32.totalorder %s41, %s42
      %p53 = scmp.eq.s32.totalorder %s19, 0
      %p54 = por %p52, %p53
      %p55 = scmp.ne.s32.totalorder %s41, %s42
      %p56 = scmp.eq.s32.totalorder %s20, 1
      %p57 = por %p55, %p56
      %p59 = scmp.ne.s32.totalorder %s42, %s58
      %p60 = scmp.eq.s32.totalorder %s20, 0
      %p61 = por %p59, %p60
      %s62 = ssub.s32 %s21, %s33
      %p63 = scmp.eq.s32.totalorder %s62, 0
      %s65 = sadd.s32 %s64, 1
      %s66 = scalar_select %p63, %s64, %s65
      %p69 = pneg %p63
      %p70 = scmp.eq.s32.totalorder %s14, 1
      %p71 = por %p69, %p70
      %p72 = scmp.ne.s32.totalorder %s64, %s67
      %p73 = scmp.eq.s32.totalorder %s14, 0
      %p74 = por %p72, %p73
      %p75 = scmp.ne.s32.totalorder %s64, %s67
      %p76 = scmp.eq.s32.totalorder %s19, 1
      %p77 = por %p75, %p76
      %p78 = scmp.ne.s32.totalorder %s67, %s68
      %p79 = scmp.eq.s32.totalorder %s19, 0
      %p80 = por %p78, %p79
      %p81 = scmp.ne.s32.totalorder %s67, %s68
      %p82 = scmp.eq.s32.totalorder %s20, 1
      %p83 = por %p81, %p82
      %p85 = scmp.ne.s32.totalorder %s68, %s84
      %p86 = scmp.eq.s32.totalorder %s20, 0
      %p87 = por %p85, %p86
      %s88 = ssub.s32 %s22, %s29
      %s89 = ssub.s32 %s21, %s33
      %s90 = sor.u32 %s88, %s89
      %p91 = scmp.eq.s32.totalorder %s90, 0
      %s93 = sadd.s32 %s92, 1
      %s94 = scalar_select %p91, %s92, %s93
      %p97 = pneg %p91
      %p98 = scmp.eq.s32.totalorder %s14, 1
      %p99 = por %p97, %p98
      %p100 = scmp.ne.s32.totalorder %s92, %s95
      %p101 = scmp.eq.s32.totalorder %s14, 0
      %p102 = por %p100, %p101
      %p103 = scmp.ne.s32.totalorder %s92, %s95
      %p104 = scmp.eq.s32.totalorder %s19, 1
      %p105 = por %p103, %p104
      %p106 = scmp.ne.s32.totalorder %s95, %s96
      %p107 = scmp.eq.s32.totalorder %s19, 0
      %p108 = por %p106, %p107
      %p109 = scmp.ne.s32.totalorder %s95, %s96
      %p110 = scmp.eq.s32.totalorder %s20, 1
      %p111 = por %p109, %p110
      %p113 = scmp.ne.s32.totalorder %s96, %s112
      %p114 = scmp.eq.s32.totalorder %s20, 0
      %p115 = por %p113, %p114
      %p116 = scmp.le.s32.totalorder 1, %s14
      %p117 = scmp.lt.s32.totalorder %s14, 3
      %p118 = pnand %p116, %p117
      %p119 = pneg %p118
      // Predicated region
      $region9: #{tpu_custom_call.1} parent=5 // pred_check
        _
      $region10: #{tpu_custom_call.1} parent=5 // pred_check_branch
        %121 = sbr.rel (%p118) target = $region12
      $region11: #{tpu_custom_call.1} parent=5 // pred_region
        %s122 = ssub.s32 %s14, 1
        // Predicated region
        $region13: #{tpu_custom_call.1} parent=11 // pred_check
          %p123 = pneg %p80
        $region14: #{tpu_custom_call.1} parent=11 // pred_check_branch
          %125 = sbr.rel (%p123) target = $region16
        $region15: #{tpu_custom_call.1} parent=11 // pred_region
          %p126 = scmp.lt.s32.totalorder %s23, 0
          %s127 = scalar_select %p126, %s23, 0
          %s128 = smul.addr %s127, 2
          %s129 = scalar_lea.vmem %s1, %s128
        $region16: #{tpu_custom_call.1} parent=11 // pred_fallthru
          _
      $region12: #{tpu_custom_call.1} parent=5 // pred_fallthru
        _
      %p130 = scmp.lt.s32.totalorder %s14, 2
      // Predicated region
      $region17: #{tpu_custom_call.1} parent=5 // pred_check
        %p131 = pneg %p130
      $region18: #{tpu_custom_call.1} parent=5 // pred_check_branch
        %133 = sbr.rel (%p131) target = $region20
      $region19: #{tpu_custom_call.1} parent=5 // pred_region
        // Predicated region
        $region21: #{tpu_custom_call.1} parent=19 // pred_check
          %p134 = pneg %p48
        $region22: #{tpu_custom_call.1} parent=19 // pred_check_branch
          %136 = sbr.rel (%p134) target = $region24
        $region23: #{tpu_custom_call.1} parent=19 // pred_region
          %s137 = sand.u32 %s38, 1
          %s138 = scalar_lea.sflag [#allocation3], %s137
          %s139 = sand.u32 %s38, 1
          %s140 = smul.addr %s139, 2
          %s141 = scalar_lea.vmem [#allocation2], %s140
          %143 = vsyncadd %s138, 0
          %s144 = smul.addr %s21, 2
          %s145 = smul.addr %s22, 2
          %s146 = sadd.s32 %s144, %s145
          %s147 = scalar_lea.hbm %s0, %s146
          %s149 = sshll.u32 %s147, 4
          %s150 = int_to_ptr.hbm [resolvable:$true] %s149
          %s151 = sshll.u32 %s141, 4
          %s152 = int_to_ptr.vmem [resolvable:$true] %s151
          %154 = dma.hbm_to_vmem [thread:$0]  %s150, 32, %s152, %s138
        $region24: #{tpu_custom_call.1} parent=19 // pred_fallthru
          _
      $region20: #{tpu_custom_call.1} parent=5 // pred_fallthru
        _
      %p155 = scmp.le.s32.totalorder 1, %s14
      %p156 = scmp.lt.s32.totalorder %s14, 3
      %p157 = pnand %p155, %p156
      %p158 = pneg %p157
      // Predicated region
      $region25: #{tpu_custom_call.1} parent=5 // pred_check
        _
      $region26: #{tpu_custom_call.1} parent=5 // pred_check_branch
        %160 = sbr.rel (%p157) target = $region28
      $region27: #{tpu_custom_call.1} parent=5 // pred_region
        %s161 = ssub.s32 %s14, 1
        %s162 = sand.u32 %s41, 1
        %s163 = scalar_lea.sflag [#allocation3], %s162
        %s164 = sand.u32 %s41, 1
        %s165 = smul.addr %s164, 2
        %s166 = scalar_lea.vmem [#allocation2], %s165
        // Predicated region
        $region29: #{tpu_custom_call.1} parent=27 // pred_check
          %p167 = pneg %p54
        $region30: #{tpu_custom_call.1} parent=27 // pred_check_branch
          %169 = sbr.rel (%p167) target = $region32
        $region31: #{tpu_custom_call.1} parent=27 // pred_region
          %171 = dma.done %s163, 32
        $region32: #{tpu_custom_call.1} parent=27 // pred_fallthru
          _
        %s172 = sand.u32 %s41, 1
        %s173 = scalar_lea.sflag [#allocation3], %s172
        %s174 = sand.u32 %s41, 1
        %s175 = smul.addr %s174, 2
        %s176 = scalar_lea.vmem [#allocation2], %s175
        %p177 = pneg %p54
        %p178 = pneg %p51
        %p179 = scmp.lt.s32.totalorder %s23, 0
        %s180 = scalar_select %p179, %s23, 0
        %s181 = smul.addr %s180, 2
        %s182 = scalar_lea.vmem %s1, %s181
        %p183 = pneg %p80
        %p184 = pneg %p77
        %p185 = pneg %p108
        %p186 = pneg %p105
        %s187 = sand.u32 %s95, 1
        %s188 = scalar_lea.sflag [#allocation4], %s187
        %s189 = sand.u32 %s95, 1
        %s190 = smul.addr %s189, 2
        %s191 = scalar_lea.vmem [#allocation5], %s190
        %p192 = scmp.lt.s32.totalorder %s23, 0
        %s193 = scalar_select %p192, %s23, 0
        %s194 = smul.addr %s193, 2
        %s195 = scalar_lea.vmem %s1, %s194
        %v196 = vld [vmem:[%s166] sm:$0x3]
        %v197 = vld [vmem:[%s195] sm:$0x3]
        %v198 = vadd.f32 %v196, %v197
        %v199 = vlaneseq
        %vm200 = vcmp.ge.s32.totalorder %v199, 0
        %vm201 = vcmp.lt.s32.totalorder %v199, 256
        %vm202 = vmand %vm200, %vm201
        %203 = vst.msk [vmem:[%s191] sm:$0x3] %vm202, %v198
        %s204 = sand.u32 %s95, 1
        %s205 = scalar_lea.sflag [#allocation4], %s204
        %s206 = sand.u32 %s95, 1
        %s207 = smul.addr %s206, 2
        %s208 = scalar_lea.vmem [#allocation5], %s207
        // Predicated region
        $region33: #{tpu_custom_call.1} parent=27 // pred_check
          %p209 = pneg %p105
        $region34: #{tpu_custom_call.1} parent=27 // pred_check_branch
          %211 = sbr.rel (%p209) target = $region36
        $region35: #{tpu_custom_call.1} parent=27 // pred_region
          %213 = vsyncadd %s205, 0
          %s214 = smul.addr %s23, 2
          %s215 = smul.addr %s24, 2
          %s216 = sadd.s32 %s214, %s215
          %s217 = scalar_lea.hbm %s2, %s216
          %s219 = sshll.u32 %s208, 4
          %s220 = int_to_ptr.vmem [resolvable:$true] %s219
          %s221 = sshll.u32 %s217, 4
          %s222 = int_to_ptr.hbm [resolvable:$true] %s221
          %224 = dma.vmem_to_hbm [thread:$0]  %s220, 32, %s222, %s205
        $region36: #{tpu_custom_call.1} parent=27 // pred_fallthru
          _
      $region28: #{tpu_custom_call.1} parent=5 // pred_fallthru
        _
      %p225 = scmp.le.s32.totalorder 2, %s14
      // Predicated region
      $region37: #{tpu_custom_call.1} parent=5 // pred_check
        %p226 = pneg %p225
      $region38: #{tpu_custom_call.1} parent=5 // pred_check_branch
        %228 = sbr.rel (%p226) target = $region40
      $region39: #{tpu_custom_call.1} parent=5 // pred_region
        %s229 = ssub.s32 %s14, 2
        // Predicated region
        $region41: #{tpu_custom_call.1} parent=39 // pred_check
          %p230 = pneg %p111
        $region42: #{tpu_custom_call.1} parent=39 // pred_check_branch
          %232 = sbr.rel (%p230) target = $region44
        $region43: #{tpu_custom_call.1} parent=39 // pred_region
          %s233 = sand.u32 %s96, 1
          %s234 = scalar_lea.sflag [#allocation4], %s233
          %s235 = sand.u32 %s96, 1
          %s236 = smul.addr %s235, 2
          %s237 = scalar_lea.vmem [#allocation5], %s236
          %239 = dma.done %s234, 32
        $region44: #{tpu_custom_call.1} parent=39 // pred_fallthru
          _
      $region40: #{tpu_custom_call.1} parent=5 // pred_fallthru
        _
    $region6: #{tpu_custom_call.1} parent=1 // loop_footer
      %s18 = sadd.s32 1, %s14
    $region7: #{tpu_custom_call.1} parent=1 // loop_footer_branch
      %13 = sbr.rel target = $region3
    $region8: #{tpu_custom_call.1} parent=1 // loop_exit
      _
    %240 = vsyncpa [#allocation3], 1
    %s241 = scalar_lea.sflag [#allocation3], 1
    %242 = vsyncpa %s241, 1
    %243 = vsyncpa [#allocation4], 1
    %s244 = scalar_lea.sflag [#allocation4], 1
    %245 = vsyncpa %s244, 1

</llo_original>
